<compile_context>
chip_gen: v6e
topology: v6e:2x2x1
jax: 0.10.0
libtpu: 0.0.40
codegen_flags: <defaults>
</compile_context>

<pallas_src>
import jax
import jax.numpy as jnp
from jax.experimental import pallas as pl
from jax.experimental.pallas import tpu as pltpu


def _round_up(x, m):
    return (x + m - 1) // m * m


def _mlp_kernel(x_ref,
                w1_ref, b1_ref,
                w2_ref, b2_ref,
                w3_ref, b3_ref,
                w4_ref, b4_ref,
                o_ref):
    # Matmul-operand dtype (f32 or bf16).  Accumulation is always f32
    # (preferred_element_type) and all elementwise math stays in f32.
    cdt = w1_ref.dtype

    x = x_ref[...].astype(cdt)

    # Linear(in, h) [BN scale folded into W] + bias + ReLU
    h = jnp.dot(x, w1_ref[...], preferred_element_type=jnp.float32) + b1_ref[...]
    h = jnp.maximum(h, 0.0)
    # Linear(h, 2h) [BN folded] + ReLU
    h = jnp.dot(h.astype(cdt), w2_ref[...],
                preferred_element_type=jnp.float32) + b2_ref[...]
    h = jnp.maximum(h, 0.0)
    # Linear(2h, h) [BN folded] + ReLU
    h = jnp.dot(h.astype(cdt), w3_ref[...],
                preferred_element_type=jnp.float32) + b3_ref[...]
    h = jnp.maximum(h, 0.0)
    # Linear(h, out)
    y = jnp.dot(h.astype(cdt), w4_ref[...],
                preferred_element_type=jnp.float32) + b4_ref[...]

    # F.normalize(y, p=2, dim=1): y / max(||y||, 1e-12)
    #   == y * rsqrt(max(sum(y^2), 1e-24)); rsqrt goes to the EUP slot.
    sumsq = jnp.sum(y * y, axis=-1, keepdims=True)
    inv = jax.lax.rsqrt(jnp.maximum(sumsq, 1e-24))
    o_ref[...] = (y * inv).astype(o_ref.dtype)


def _pick_row_tile(n, tm):
    """Row tile: one full block for tiny inputs, two blocks for medium inputs
    (so v7x's two TensorCores both get work), fixed big tiles beyond that."""
    if n <= 256:
        return n                         # full-dim block (legal even if n % 8 != 0)
    tm = max(8, (tm // 8) * 8)           # tiled blocks must be sublane(8)-aligned
    if n <= tm:
        return _round_up(pl.cdiv(n, 2), 8)
    return tm


def phase_pick_mlp_forward(pick_features, folded_params, *, tm=4096):
    """pick_features: (batch, picks, in_feats); folded_params from
    fold_params_for_kernel (eval-mode BN folded into W; weights f32 or bf16)."""
    batch, picks, in_feats = pick_features.shape
    n = batch * picks
    w1, b1, w2, b2, w3, b3, w4, b4 = folded_params
    out_feats = w4.shape[1]

    x2d = pick_features.reshape(n, in_feats)
    # Callers should supply x already in the matmul dtype (bf16 halves the
    # dominant HBM read traffic); this cast is only a safety net.
    if x2d.dtype != w1.dtype:
        x2d = x2d.astype(w1.dtype)

    tm_eff = _pick_row_tile(n, tm)
    grid = (pl.cdiv(n, tm_eff),)

    def resident(arr):  # small VMEM-resident operand, same block every step
        nd = arr.ndim
        return pl.BlockSpec(arr.shape, lambda i, _nd=nd: (0,) * _nd)

    params = (w1, b1, w2, b2, w3, b3, w4, b4)
    flops = 2 * n * sum(int(w.shape[0]) * int(w.shape[1])
                        for w in (w1, w2, w3, w4))
    bytes_accessed = (n * in_feats * x2d.dtype.itemsize
                      + n * out_feats * 4
                      + sum(int(p.size) * p.dtype.itemsize for p in params))

    out = pl.pallas_call(
        _mlp_kernel,
        out_shape=jax.ShapeDtypeStruct((n, out_feats), jnp.float32),
        grid_spec=pltpu.PrefetchScalarGridSpec(
            num_scalar_prefetch=0,
            grid=grid,
            in_specs=[pl.BlockSpec((tm_eff, in_feats), lambda i: (i, 0))]
                     + [resident(p) for p in params],
            out_specs=pl.BlockSpec((tm_eff, out_feats), lambda i: (i, 0)),
        ),
        compiler_params=pltpu.CompilerParams(
            dimension_semantics=("parallel",)),
        cost_estimate=pl.CostEstimate(
            flops=flops, transcendentals=n, bytes_accessed=bytes_accessed),
    )(x2d, *params)

    return out.reshape(batch, picks, out_feats)


def init_raw_params(key, in_feats, h_feats, out_feats):
    """Deterministic synthetic 'PyTorch-style' parameters.

    layers 0..2: Linear (W (din,dout), b) + BatchNorm1d (gamma, beta, mean, var)
    layer 3:     Linear (W, b) only.  Weights stored (din, dout) so fwd is x @ W.
    """
    dims = [(in_feats, h_feats), (h_feats, 2 * h_feats),
            (2 * h_feats, h_feats), (h_feats, out_feats)]
    keys = jax.random.split(key, 16)
    ki = iter(keys)
    layers = []
    for li, (din, dout) in enumerate(dims):
        w = jax.random.normal(next(ki), (din, dout), jnp.float32) * 0.1
        b = jax.random.normal(next(ki), (1, dout), jnp.float32) * 0.05
        layer = {"w": w, "b": b}
        if li < 3:
            layer["gamma"] = 1.0 + 0.1 * jax.random.normal(next(ki), (1, dout), jnp.float32)
            layer["beta"] = 0.05 * jax.random.normal(next(ki), (1, dout), jnp.float32)
            layer["mean"] = 0.02 * jnp.arange(dout, dtype=jnp.float32).reshape(1, dout)
            layer["var"] = 1.0 + 0.01 * jnp.arange(dout, dtype=jnp.float32).reshape(1, dout)
        layers.append(layer)
    return layers


def fold_params_for_kernel(layers, eps=1e-5, dtype=jnp.float32):
    """Fold eval-mode BatchNorm into the preceding Linear.  Weights are cast
    to `dtype` (the MXU operand dtype); biases stay f32 (added post-matmul)."""
    folded = []
    for li, layer in enumerate(layers):
        w, b = layer["w"], layer["b"]
        if li < 3:
            s = layer["gamma"] / jnp.sqrt(layer["var"] + eps)       # (1, dout)
            w_f = w * s
            b_f = (b - layer["mean"]) * s + layer["beta"]
        else:
            w_f, b_f = w, b
        folded.extend([w_f.astype(dtype), b_f.astype(jnp.float32)])
    return tuple(folded)


def reference_forward(pick_features, layers, eps=1e-5):
    """Pure-JAX f32 reference matching the PyTorch module (eval mode)."""
    batch, picks, in_feats = pick_features.shape
    x = pick_features.reshape(-1, in_feats).astype(jnp.float32)
    for li, layer in enumerate(layers):
        x = x @ layer["w"] + layer["b"]
        if li < 3:
            x = (x - layer["mean"]) / jnp.sqrt(layer["var"] + eps)
            x = x * layer["gamma"] + layer["beta"]
            x = jnp.maximum(x, 0.0)
    norm = jnp.sqrt(jnp.sum(x * x, axis=-1, keepdims=True))
    x = x / jnp.maximum(norm, 1e-12)
    return x.reshape(batch, picks, -1)


if __name__ == "__main__":
    # Small shapes consistent with the module's forward.
    batch, picks = 2, 8
    in_feats, h_feats, out_feats = 16, 32, 8

    key = jax.random.PRNGKey(0)
    k_x, k_p, k_x2 = jax.random.split(key, 3)
    pick_features = jax.random.normal(k_x, (batch, picks, in_feats), jnp.float32)

    layers = init_raw_params(k_p, in_feats, h_feats, out_feats)
    ref = reference_forward(pick_features, layers)

    # 1) f32 path: exact check against the PyTorch-semantics reference.
    folded_f32 = fold_params_for_kernel(layers, dtype=jnp.float32)
    out_f32 = jax.block_until_ready(phase_pick_mlp_forward(pick_features, folded_f32))
    assert out_f32.shape == (batch, picks, out_feats)
    assert jnp.allclose(out_f32, ref, atol=1e-5, rtol=1e-5)

    # 2) bf16-operand path (halved HBM read bytes, f32 accumulation): expected
    #    deviation from the f32 reference is ~1e-2 from bf16 quantization of
    #    x and the weights, so this is a loose sanity check only.
    folded_bf16 = fold_params_for_kernel(layers, dtype=jnp.bfloat16)
    out_bf16 = jax.block_until_ready(
        phase_pick_mlp_forward(pick_features.astype(jnp.bfloat16), folded_bf16))
    assert out_bf16.shape == (batch, picks, out_feats)
    assert jnp.allclose(out_bf16, ref, atol=5e-2, rtol=5e-2)

    # 3) Multi-step grid with a non-dividing row count (exercises the
    #    unpadded cdiv grid + partial boundary block).
    batch2, picks2 = 3, 1500          # n = 4500 > tm=4096 -> 2 grid steps
    x2 = jax.random.normal(k_x2, (batch2, picks2, in_feats), jnp.float32)
    out2 = jax.block_until_ready(phase_pick_mlp_forward(x2, folded_f32))
    ref2 = reference_forward(x2, layers)
    assert jnp.allclose(out2, ref2, atol=1e-5, rtol=1e-5)

    print("KERNEL_OK")
</pallas_src>

<mosaic_0001>
module attributes {stable_mosaic.version = 11 : i64} {
  func.func @_mlp_kernel(%arg0: i32, %arg1: memref<16x16xf32, #tpu.memory_space<vmem>>, %arg2: memref<16x32xf32, #tpu.memory_space<vmem>>, %arg3: memref<1x32xf32, #tpu.memory_space<vmem>>, %arg4: memref<32x64xf32, #tpu.memory_space<vmem>>, %arg5: memref<1x64xf32, #tpu.memory_space<vmem>>, %arg6: memref<64x32xf32, #tpu.memory_space<vmem>>, %arg7: memref<1x32xf32, #tpu.memory_space<vmem>>, %arg8: memref<32x8xf32, #tpu.memory_space<vmem>>, %arg9: memref<1x8xf32, #tpu.memory_space<vmem>>, %arg10: memref<16x8xf32, #tpu.memory_space<vmem>>) attributes {dimension_semantics = [#tpu.dimension_semantics<parallel>], iteration_bounds = array<i64: 1>, scalar_prefetch = 0 : i64, scratch_operands = 0 : i64, tpu.core_type = #tpu.core_type<tc>, window_params = [{transform_indices = @transform_0, window_bounds = array<i64: 16, 16>}, {pipeline_mode = #tpu.pipeline_mode<synchronous>, transform_indices = @transform_1, window_bounds = array<i64: 16, 32>}, {pipeline_mode = #tpu.pipeline_mode<synchronous>, transform_indices = @transform_2, window_bounds = array<i64: 1, 32>}, {pipeline_mode = #tpu.pipeline_mode<synchronous>, transform_indices = @transform_3, window_bounds = array<i64: 32, 64>}, {pipeline_mode = #tpu.pipeline_mode<synchronous>, transform_indices = @transform_4, window_bounds = array<i64: 1, 64>}, {pipeline_mode = #tpu.pipeline_mode<synchronous>, transform_indices = @transform_5, window_bounds = array<i64: 64, 32>}, {pipeline_mode = #tpu.pipeline_mode<synchronous>, transform_indices = @transform_6, window_bounds = array<i64: 1, 32>}, {pipeline_mode = #tpu.pipeline_mode<synchronous>, transform_indices = @transform_7, window_bounds = array<i64: 32, 8>}, {pipeline_mode = #tpu.pipeline_mode<synchronous>, transform_indices = @transform_8, window_bounds = array<i64: 1, 8>}, {transform_indices = @transform_9, window_bounds = array<i64: 16, 8>}]} {
    %c0 = arith.constant 0 : index
    %c0_0 = arith.constant 0 : index
    %0 = vector.load %arg1[%c0, %c0_0] : memref<16x16xf32, #tpu.memory_space<vmem>>, vector<16x16xf32>
    %c0_1 = arith.constant 0 : index
    %c0_2 = arith.constant 0 : index
    %1 = vector.load %arg2[%c0_1, %c0_2] : memref<16x32xf32, #tpu.memory_space<vmem>>, vector<16x32xf32>
    %cst = arith.constant dense<0.000000e+00> : vector<16x32xf32>
    %2 = tpu.matmul %0, %1, %cst {dimension_numbers = #tpu.dot_dimension_numbers<[1], [0], [0], [1], [0, 0, 1, 1], [], []>} : vector<16x16xf32>, vector<16x32xf32>, vector<16x32xf32> -> vector<16x32xf32>
    %c0_3 = arith.constant 0 : index
    %c0_4 = arith.constant 0 : index
    %3 = vector.load %arg3[%c0_3, %c0_4] : memref<1x32xf32, #tpu.memory_space<vmem>>, vector<1x32xf32>
    %4 = vector.broadcast %3 : vector<1x32xf32> to vector<16x32xf32>
    %5 = arith.addf %2, %4 : vector<16x32xf32>
    %cst_5 = arith.constant 0.000000e+00 : f32
    %6 = vector.broadcast %cst_5 : f32 to vector<16x32xf32>
    %7 = arith.maximumf %5, %6 : vector<16x32xf32>
    %c0_6 = arith.constant 0 : index
    %c0_7 = arith.constant 0 : index
    %8 = vector.load %arg4[%c0_6, %c0_7] : memref<32x64xf32, #tpu.memory_space<vmem>>, vector<32x64xf32>
    %cst_8 = arith.constant dense<0.000000e+00> : vector<16x64xf32>
    %9 = tpu.matmul %7, %8, %cst_8 {dimension_numbers = #tpu.dot_dimension_numbers<[1], [0], [0], [1], [0, 0, 1, 1], [], []>} : vector<16x32xf32>, vector<32x64xf32>, vector<16x64xf32> -> vector<16x64xf32>
    %c0_9 = arith.constant 0 : index
    %c0_10 = arith.constant 0 : index
    %10 = vector.load %arg5[%c0_9, %c0_10] : memref<1x64xf32, #tpu.memory_space<vmem>>, vector<1x64xf32>
    %11 = vector.broadcast %10 : vector<1x64xf32> to vector<16x64xf32>
    %12 = arith.addf %9, %11 : vector<16x64xf32>
    %cst_11 = arith.constant 0.000000e+00 : f32
    %13 = vector.broadcast %cst_11 : f32 to vector<16x64xf32>
    %14 = arith.maximumf %12, %13 : vector<16x64xf32>
    %c0_12 = arith.constant 0 : index
    %c0_13 = arith.constant 0 : index
    %15 = vector.load %arg6[%c0_12, %c0_13] : memref<64x32xf32, #tpu.memory_space<vmem>>, vector<64x32xf32>
    %cst_14 = arith.constant dense<0.000000e+00> : vector<16x32xf32>
    %16 = tpu.matmul %14, %15, %cst_14 {dimension_numbers = #tpu.dot_dimension_numbers<[1], [0], [0], [1], [0, 0, 1, 1], [], []>} : vector<16x64xf32>, vector<64x32xf32>, vector<16x32xf32> -> vector<16x32xf32>
    %c0_15 = arith.constant 0 : index
    %c0_16 = arith.constant 0 : index
    %17 = vector.load %arg7[%c0_15, %c0_16] : memref<1x32xf32, #tpu.memory_space<vmem>>, vector<1x32xf32>
    %18 = vector.broadcast %17 : vector<1x32xf32> to vector<16x32xf32>
    %19 = arith.addf %16, %18 : vector<16x32xf32>
    %cst_17 = arith.constant 0.000000e+00 : f32
    %20 = vector.broadcast %cst_17 : f32 to vector<16x32xf32>
    %21 = arith.maximumf %19, %20 : vector<16x32xf32>
    %c0_18 = arith.constant 0 : index
    %c0_19 = arith.constant 0 : index
    %22 = vector.load %arg8[%c0_18, %c0_19] : memref<32x8xf32, #tpu.memory_space<vmem>>, vector<32x8xf32>
    %cst_20 = arith.constant dense<0.000000e+00> : vector<16x8xf32>
    %23 = tpu.matmul %21, %22, %cst_20 {dimension_numbers = #tpu.dot_dimension_numbers<[1], [0], [0], [1], [0, 0, 1, 1], [], []>} : vector<16x32xf32>, vector<32x8xf32>, vector<16x8xf32> -> vector<16x8xf32>
    %c0_21 = arith.constant 0 : index
    %c0_22 = arith.constant 0 : index
    %24 = vector.load %arg9[%c0_21, %c0_22] : memref<1x8xf32, #tpu.memory_space<vmem>>, vector<1x8xf32>
    %25 = vector.broadcast %24 : vector<1x8xf32> to vector<16x8xf32>
    %26 = arith.addf %23, %25 : vector<16x8xf32>
    %27 = arith.mulf %26, %26 : vector<16x8xf32>
    %cst_23 = arith.constant dense<0.000000e+00> : vector<16xf32>
    %28 = vector.multi_reduction <add>, %27, %cst_23 [1] : vector<16x8xf32> to vector<16xf32>
    %29 = vector.shape_cast %28 : vector<16xf32> to vector<16x1xf32>
    %cst_24 = arith.constant 1.000000e-24 : f32
    %30 = vector.broadcast %cst_24 : f32 to vector<16x1xf32>
    %31 = arith.maximumf %29, %30 : vector<16x1xf32>
    %32 = math.rsqrt %31 : vector<16x1xf32>
    %33 = vector.broadcast %32 : vector<16x1xf32> to vector<16x8xf32>
    %34 = arith.mulf %26, %33 : vector<16x8xf32>
    %c0_25 = arith.constant 0 : index
    %c0_26 = arith.constant 0 : index
    %35 = vector.load %arg10[%c0_25, %c0_26] : memref<16x8xf32, #tpu.memory_space<vmem>>, vector<16x8xf32>
    tpu.vector_store %arg10[%c0_25, %c0_26], %34 {strides = array<i32>} : memref<16x8xf32, #tpu.memory_space<vmem>>, vector<16x8xf32>,
    return
  }
  func.func @transform_0(%arg0: i32) -> (i32, i32) {
    %c0_i32 = arith.constant 0 : i32
    %c0_i32_0 = arith.constant 0 : i32
    return %arg0, %c0_i32 : i32, i32
  }
  func.func @transform_1(%arg0: i32) -> (i32, i32) {
    %c0_i32 = arith.constant 0 : i32
    %c0_i32_0 = arith.constant 0 : i32
    %c0_i32_1 = arith.constant 0 : i32
    return %c0_i32, %c0_i32_0 : i32, i32
  }
  func.func @transform_2(%arg0: i32) -> (i32, i32) {
    %c0_i32 = arith.constant 0 : i32
    %c0_i32_0 = arith.constant 0 : i32
    %c0_i32_1 = arith.constant 0 : i32
    return %c0_i32, %c0_i32_0 : i32, i32
  }
  func.func @transform_3(%arg0: i32) -> (i32, i32) {
    %c0_i32 = arith.constant 0 : i32
    %c0_i32_0 = arith.constant 0 : i32
    %c0_i32_1 = arith.constant 0 : i32
    return %c0_i32, %c0_i32_0 : i32, i32
  }
  func.func @transform_4(%arg0: i32) -> (i32, i32) {
    %c0_i32 = arith.constant 0 : i32
    %c0_i32_0 = arith.constant 0 : i32
    %c0_i32_1 = arith.constant 0 : i32
    return %c0_i32, %c0_i32_0 : i32, i32
  }
  func.func @transform_5(%arg0: i32) -> (i32, i32) {
    %c0_i32 = arith.constant 0 : i32
    %c0_i32_0 = arith.constant 0 : i32
    %c0_i32_1 = arith.constant 0 : i32
    return %c0_i32, %c0_i32_0 : i32, i32
  }
  func.func @transform_6(%arg0: i32) -> (i32, i32) {
    %c0_i32 = arith.constant 0 : i32
    %c0_i32_0 = arith.constant 0 : i32
    %c0_i32_1 = arith.constant 0 : i32
    return %c0_i32, %c0_i32_0 : i32, i32
  }
  func.func @transform_7(%arg0: i32) -> (i32, i32) {
    %c0_i32 = arith.constant 0 : i32
    %c0_i32_0 = arith.constant 0 : i32
    %c0_i32_1 = arith.constant 0 : i32
    return %c0_i32, %c0_i32_0 : i32, i32
  }
  func.func @transform_8(%arg0: i32) -> (i32, i32) {
    %c0_i32 = arith.constant 0 : i32
    %c0_i32_0 = arith.constant 0 : i32
    %c0_i32_1 = arith.constant 0 : i32
    return %c0_i32, %c0_i32_0 : i32, i32
  }
  func.func @transform_9(%arg0: i32) -> (i32, i32) {
    %c0_i32 = arith.constant 0 : i32
    %c0_i32_0 = arith.constant 0 : i32
    return %arg0, %c0_i32 : i32, i32
  }
}

</mosaic_0001>

<llo_original>
// kernel: tpu_custom_call.1
$region0: #{tpu_custom_call.1}
  #allocation0 [shape = 'u32[]', space=smem, size = 0x4, offset = 0x4, fixed_abs, tag = 'smem constant byte address 0x4 - core index']
  #allocation1 [shape = 'u32[144,128]{1,0:T(1,128)}', space=vmem, size = 0x12000, scoped, tag = 'internal scratch']
  %s0 = inlined_call_operand.vmem [shape: f32[16,16], index: 0, kind: input, shape index: {}]
  %s1 = inlined_call_operand.vmem [shape: f32[16,32], index: 1, kind: input, shape index: {}]
  %s2 = inlined_call_operand.vmem [shape: f32[1,32], index: 2, kind: input, shape index: {}]
  %s3 = inlined_call_operand.vmem [shape: f32[32,64], index: 3, kind: input, shape index: {}]
  %s4 = inlined_call_operand.vmem [shape: f32[1,64], index: 4, kind: input, shape index: {}]
  %s5 = inlined_call_operand.vmem [shape: f32[64,32], index: 5, kind: input, shape index: {}]
  %s6 = inlined_call_operand.vmem [shape: f32[1,32], index: 6, kind: input, shape index: {}]
  %s7 = inlined_call_operand.vmem [shape: f32[32,8], index: 7, kind: input, shape index: {}]
  %s8 = inlined_call_operand.vmem [shape: f32[1,8], index: 8, kind: input, shape index: {}]
  %s9 = inlined_call_operand.vmem [shape: f32[16,8], index: 9, kind: output, shape index: {}]
  %s10 = sld [smem:[#allocation0]]
  $region46: #{tpu_custom_call.1} parent=0
    _
  %s12 = ssub.s32 1, %s10
  %s13 = scalar_select 0, %s12, %s10
  // Predicated region
  $region2: #{tpu_custom_call.1} parent=0 // pred_check
    _
  $region3: #{tpu_custom_call.1} parent=0 // pred_check_branch
    %15 = sbr.rel (0) target = $region5
  $region4: #{tpu_custom_call.1} parent=0 // pred_region
    _
  $region5: #{tpu_custom_call.1} parent=0 // pred_fallthru
    _
  // Predicated region
  $region6: #{tpu_custom_call.1} parent=0 // pred_check
    _
  $region7: #{tpu_custom_call.1} parent=0 // pred_check_branch
    %17 = sbr.rel (0) target = $region9
  $region8: #{tpu_custom_call.1} parent=0 // pred_region
    _
  $region9: #{tpu_custom_call.1} parent=0 // pred_fallthru
    _
  // Predicated region
  $region10: #{tpu_custom_call.1} parent=0 // pred_check
    _
  $region11: #{tpu_custom_call.1} parent=0 // pred_check_branch
    %19 = sbr.rel (0) target = $region13
  $region12: #{tpu_custom_call.1} parent=0 // pred_region
    _
  $region13: #{tpu_custom_call.1} parent=0 // pred_fallthru
    _
  // Predicated region
  $region14: #{tpu_custom_call.1} parent=0 // pred_check
    _
  $region15: #{tpu_custom_call.1} parent=0 // pred_check_branch
    %21 = sbr.rel (0) target = $region17
  $region16: #{tpu_custom_call.1} parent=0 // pred_region
    _
  $region17: #{tpu_custom_call.1} parent=0 // pred_fallthru
    _
  // Predicated region
  $region18: #{tpu_custom_call.1} parent=0 // pred_check
    _
  $region19: #{tpu_custom_call.1} parent=0 // pred_check_branch
    %23 = sbr.rel (0) target = $region21
  $region20: #{tpu_custom_call.1} parent=0 // pred_region
    _
  $region21: #{tpu_custom_call.1} parent=0 // pred_fallthru
    _
  // Predicated region
  $region22: #{tpu_custom_call.1} parent=0 // pred_check
    _
  $region23: #{tpu_custom_call.1} parent=0 // pred_check_branch
    %25 = sbr.rel (0) target = $region25
  $region24: #{tpu_custom_call.1} parent=0 // pred_region
    _
  $region25: #{tpu_custom_call.1} parent=0 // pred_fallthru
    _
  // Predicated region
  $region26: #{tpu_custom_call.1} parent=0 // pred_check
    _
  $region27: #{tpu_custom_call.1} parent=0 // pred_check_branch
    %27 = sbr.rel (0) target = $region29
  $region28: #{tpu_custom_call.1} parent=0 // pred_region
    _
  $region29: #{tpu_custom_call.1} parent=0 // pred_fallthru
    _
  // Predicated region
  $region30: #{tpu_custom_call.1} parent=0 // pred_check
    _
  $region31: #{tpu_custom_call.1} parent=0 // pred_check_branch
    %29 = sbr.rel (0) target = $region33
  $region32: #{tpu_custom_call.1} parent=0 // pred_region
    _
  $region33: #{tpu_custom_call.1} parent=0 // pred_fallthru
    _
  // Predicated region
  $region34: #{tpu_custom_call.1} parent=0 // pred_check
    _
  $region35: #{tpu_custom_call.1} parent=0 // pred_check_branch
    %31 = sbr.rel (0) target = $region37
  $region36: #{tpu_custom_call.1} parent=0 // pred_region
    _
  $region37: #{tpu_custom_call.1} parent=0 // pred_fallthru
    _
  %v32 = vld [vmem:[%s0] sm:$0xff]
  %v33 = vld [vmem:[%s0 + $0x8] sm:$0xff]
  %v34 = vld [vmem:[%s1] sm:$0xff]
  %v35 = vld [vmem:[%s1 + $0x8] sm:$0xff]
  %v36 = vld [vmem:[%s2] sm:$0x1]
  %v38 = vlaneseq
  %v39 = vshrl.u32 %v38, 7
  %v40 = vsub.s32 0, %v39
  %v41 = vrot.slane %v36, %v40
  %vm43 = vcmask 130048
  %v45 = vsel %vm43, %v32, 0
  %v48 = vsel %vm43, %v33, 0
  %50 = vmatprep.subr.mxu0 0.0
  %51 = vmatpush1.msra.mxu0 0.0
  %52 = vmatprep.subr.mxu0 0.0
  %53 = vmatpush1.msra.mxu0 0.0
  %54 = vmatprep.subr.mxu0 0.0
  %55 = vmatpush1.msra.mxu0 0.0
  %56 = vmatprep.subr.mxu0 0.0
  %57 = vmatpush1.msra.mxu0 0.0
  %58 = vmatprep.subr.mxu0 0.0
  %59 = vmatpush1.msra.mxu0 0.0
  %60 = vmatprep.subr.mxu0 0.0
  %61 = vmatpush1.msra.mxu0 0.0
  %62 = vmatprep.subr.mxu0 0.0
  %63 = vmatpush1.msra.mxu0 0.0
  %64 = vmatprep.subr.mxu0 0.0
  %65 = vmatpush1.msra.mxu0 0.0
  %66 = vmatprep.subr.mxu0 0.0
  %67 = vmatpush1.msra.mxu0 0.0
  %68 = vmatprep.subr.mxu0 0.0
  %69 = vmatpush1.msra.mxu0 0.0
  %70 = vmatprep.subr.mxu0 0.0
  %71 = vmatpush1.msra.mxu0 0.0
  %72 = vmatprep.subr.mxu0 0.0
  %73 = vmatpush1.msra.mxu0 0.0
  %74 = vmatprep.subr.mxu0 0.0
  %75 = vmatpush1.msra.mxu0 0.0
  %76 = vmatprep.subr.mxu0 0.0
  %77 = vmatpush1.msra.mxu0 0.0
  %78 = vmatprep.subr.mxu0 0.0
  %79 = vmatpush1.msra.mxu0 %v35
  %80 = vmatprep.subr.mxu0 0.0
  %81 = vmatpush1.msra.mxu0 %v34
  %82 = vmatprep.subr.mxu0 0.0
  %83 = vmatpush2.msra.mxu0 0.0
  %84 = vmatprep.subr.mxu0 0.0
  %85 = vmatpush2.msra.mxu0 0.0
  %86 = vmatprep.subr.mxu0 0.0
  %87 = vmatpush2.msra.mxu0 0.0
  %88 = vmatprep.subr.mxu0 0.0
  %89 = vmatpush2.msra.mxu0 0.0
  %90 = vmatprep.subr.mxu0 0.0
  %91 = vmatpush2.msra.mxu0 0.0
  %92 = vmatprep.subr.mxu0 0.0
  %93 = vmatpush2.msra.mxu0 0.0
  %94 = vmatprep.subr.mxu0 0.0
  %95 = vmatpush2.msra.mxu0 0.0
  %96 = vmatprep.subr.mxu0 0.0
  %97 = vmatpush2.msra.mxu0 0.0
  %98 = vmatprep.subr.mxu0 0.0
  %99 = vmatpush2.msra.mxu0 0.0
  %100 = vmatprep.subr.mxu0 0.0
  %101 = vmatpush2.msra.mxu0 0.0
  %102 = vmatprep.subr.mxu0 0.0
  %103 = vmatpush2.msra.mxu0 0.0
  %104 = vmatprep.subr.mxu0 0.0
  %105 = vmatpush2.msra.mxu0 0.0
  %106 = vmatprep.subr.mxu0 0.0
  %107 = vmatpush2.msra.mxu0 0.0
  %108 = vmatprep.subr.mxu0 0.0
  %109 = vmatpush2.msra.mxu0 0.0
  %110 = vmatprep.subr.mxu0 0.0
  %111 = vmatpush2.msra.mxu0 0.0
  %112 = vmatprep.subr.mxu0 0.0
  %113 = vmatpush2.msra.mxu0 0.0
  %114 = vmatprep.mubr.f32.mxu0 0.0
  %115 = vmatmul.mubr.f32.gmra.mxu0 %v45
  %v116 = vpop.f32.mrf.mxu0
  %v117 = vadd.f32 %v41, %v116
  %v118 = vpop.f32.mrf.mxu0
  %119 = vmatprep.mubr.f32.mxu0 0.0
  %120 = vmatmul.mubr.f32.gmra.mxu0 %v48
  %v121 = vpop.f32.mrf.mxu0
  %v122 = vadd.f32 %v41, %v121
  %v123 = vpop.f32.mrf.mxu0
  %124 = vdwg.mxu0
  %v125 = vmax.f32 %v117, 0.0
  %v126 = vmax.f32 %v122, 0.0
  %v127 = vld [vmem:[%s3] sm:$0xff]
  %v128 = vld [vmem:[%s3 + $0x8] sm:$0xff]
  %v129 = vld [vmem:[%s3 + $0x10] sm:$0xff]
  %v130 = vld [vmem:[%s3 + $0x18] sm:$0xff]
  %v131 = vld [vmem:[%s4] sm:$0x1]
  %v133 = vlaneseq
  %v134 = vshrl.u32 %v133, 7
  %v135 = vsub.s32 0, %v134
  %v136 = vrot.slane %v131, %v135
  %vm138 = vcmask 261120
  %v140 = vsel %vm138, %v125, 0
  %v143 = vsel %vm138, %v126, 0
  %145 = vmatprep.subr.mxu0 0.0
  %146 = vmatpush1.msra.mxu0 0.0
  %147 = vmatprep.subr.mxu0 0.0
  %148 = vmatpush1.msra.mxu0 0.0
  %149 = vmatprep.subr.mxu0 0.0
  %150 = vmatpush1.msra.mxu0 0.0
  %151 = vmatprep.subr.mxu0 0.0
  %152 = vmatpush1.msra.mxu0 0.0
  %153 = vmatprep.subr.mxu0 0.0
  %154 = vmatpush1.msra.mxu0 0.0
  %155 = vmatprep.subr.mxu0 0.0
  %156 = vmatpush1.msra.mxu0 0.0
  %157 = vmatprep.subr.mxu0 0.0
  %158 = vmatpush1.msra.mxu0 0.0
  %159 = vmatprep.subr.mxu0 0.0
  %160 = vmatpush1.msra.mxu0 0.0
  %161 = vmatprep.subr.mxu0 0.0
  %162 = vmatpush1.msra.mxu0 0.0
  %163 = vmatprep.subr.mxu0 0.0
  %164 = vmatpush1.msra.mxu0 0.0
  %165 = vmatprep.subr.mxu0 0.0
  %166 = vmatpush1.msra.mxu0 0.0
  %167 = vmatprep.subr.mxu0 0.0
  %168 = vmatpush1.msra.mxu0 0.0
  %169 = vmatprep.subr.mxu0 0.0
  %170 = vmatpush1.msra.mxu0 %v130
  %171 = vmatprep.subr.mxu0 0.0
  %172 = vmatpush1.msra.mxu0 %v129
  %173 = vmatprep.subr.mxu0 0.0
  %174 = vmatpush1.msra.mxu0 %v128
  %175 = vmatprep.subr.mxu0 0.0
  %176 = vmatpush1.msra.mxu0 %v127
  %177 = vmatprep.subr.mxu0 0.0
  %178 = vmatpush2.msra.mxu0 0.0
  %179 = vmatprep.subr.mxu0 0.0
  %180 = vmatpush2.msra.mxu0 0.0
  %181 = vmatprep.subr.mxu0 0.0
  %182 = vmatpush2.msra.mxu0 0.0
  %183 = vmatprep.subr.mxu0 0.0
  %184 = vmatpush2.msra.mxu0 0.0
  %185 = vmatprep.subr.mxu0 0.0
  %186 = vmatpush2.msra.mxu0 0.0
  %187 = vmatprep.subr.mxu0 0.0
  %188 = vmatpush2.msra.mxu0 0.0
  %189 = vmatprep.subr.mxu0 0.0
  %190 = vmatpush2.msra.mxu0 0.0
  %191 = vmatprep.subr.mxu0 0.0
  %192 = vmatpush2.msra.mxu0 0.0
  %193 = vmatprep.subr.mxu0 0.0
  %194 = vmatpush2.msra.mxu0 0.0
  %195 = vmatprep.subr.mxu0 0.0
  %196 = vmatpush2.msra.mxu0 0.0
  %197 = vmatprep.subr.mxu0 0.0
  %198 = vmatpush2.msra.mxu0 0.0
  %199 = vmatprep.subr.mxu0 0.0
  %200 = vmatpush2.msra.mxu0 0.0
  %201 = vmatprep.subr.mxu0 0.0
  %202 = vmatpush2.msra.mxu0 0.0
  %203 = vmatprep.subr.mxu0 0.0
  %204 = vmatpush2.msra.mxu0 0.0
  %205 = vmatprep.subr.mxu0 0.0
  %206 = vmatpush2.msra.mxu0 0.0
  %207 = vmatprep.subr.mxu0 0.0
  %208 = vmatpush2.msra.mxu0 0.0
  %209 = vmatprep.mubr.f32.mxu0 0.0
  %210 = vmatmul.mubr.f32.gmra.mxu0 %v140
  %v211 = vpop.f32.mrf.mxu0
  %v212 = vadd.f32 %v136, %v211
  %v213 = vpop.f32.mrf.mxu0
  %214 = vmatprep.mubr.f32.mxu0 0.0
  %215 = vmatmul.mubr.f32.gmra.mxu0 %v143
  %v216 = vpop.f32.mrf.mxu0
  %v217 = vadd.f32 %v136, %v216
  %v218 = vpop.f32.mrf.mxu0
  %219 = vdwg.mxu0
  %v220 = vmax.f32 %v212, 0.0
  %v221 = vmax.f32 %v217, 0.0
  %v222 = vld [vmem:[%s5] sm:$0xff]
  %v223 = vld [vmem:[%s5 + $0x8] sm:$0xff]
  %v224 = vld [vmem:[%s5 + $0x10] sm:$0xff]
  %v225 = vld [vmem:[%s5 + $0x18] sm:$0xff]
  %v226 = vld [vmem:[%s5 + $0x20] sm:$0xff]
  %v227 = vld [vmem:[%s5 + $0x28] sm:$0xff]
  %v228 = vld [vmem:[%s5 + $0x30] sm:$0xff]
  %v229 = vld [vmem:[%s5 + $0x38] sm:$0xff]
  %v230 = vld [vmem:[%s6] sm:$0x1]
  %v232 = vlaneseq
  %v233 = vshrl.u32 %v232, 7
  %v234 = vsub.s32 0, %v233
  %v235 = vrot.slane %v230, %v234
  %vm237 = vcmask 523264
  %v239 = vsel %vm237, %v220, 0
  %v242 = vsel %vm237, %v221, 0
  %244 = vmatprep.subr.mxu0 0.0
  %245 = vmatpush1.msra.mxu0 0.0
  %246 = vmatprep.subr.mxu0 0.0
  %247 = vmatpush1.msra.mxu0 0.0
  %248 = vmatprep.subr.mxu0 0.0
  %249 = vmatpush1.msra.mxu0 0.0
  %250 = vmatprep.subr.mxu0 0.0
  %251 = vmatpush1.msra.mxu0 0.0
  %252 = vmatprep.subr.mxu0 0.0
  %253 = vmatpush1.msra.mxu0 0.0
  %254 = vmatprep.subr.mxu0 0.0
  %255 = vmatpush1.msra.mxu0 0.0
  %256 = vmatprep.subr.mxu0 0.0
  %257 = vmatpush1.msra.mxu0 0.0
  %258 = vmatprep.subr.mxu0 0.0
  %259 = vmatpush1.msra.mxu0 0.0
  %260 = vmatprep.subr.mxu0 0.0
  %261 = vmatpush1.msra.mxu0 %v229
  %262 = vmatprep.subr.mxu0 0.0
  %263 = vmatpush1.msra.mxu0 %v228
  %264 = vmatprep.subr.mxu0 0.0
  %265 = vmatpush1.msra.mxu0 %v227
  %266 = vmatprep.subr.mxu0 0.0
  %267 = vmatpush1.msra.mxu0 %v226
  %268 = vmatprep.subr.mxu0 0.0
  %269 = vmatpush1.msra.mxu0 %v225
  %270 = vmatprep.subr.mxu0 0.0
  %271 = vmatpush1.msra.mxu0 %v224
  %272 = vmatprep.subr.mxu0 0.0
  %273 = vmatpush1.msra.mxu0 %v223
  %274 = vmatprep.subr.mxu0 0.0
  %275 = vmatpush1.msra.mxu0 %v222
  %276 = vmatprep.subr.mxu0 0.0
  %277 = vmatpush2.msra.mxu0 0.0
  %278 = vmatprep.subr.mxu0 0.0
  %279 = vmatpush2.msra.mxu0 0.0
  %280 = vmatprep.subr.mxu0 0.0
  %281 = vmatpush2.msra.mxu0 0.0
  %282 = vmatprep.subr.mxu0 0.0
  %283 = vmatpush2.msra.mxu0 0.0
  %284 = vmatprep.subr.mxu0 0.0
  %285 = vmatpush2.msra.mxu0 0.0
  %286 = vmatprep.subr.mxu0 0.0
  %287 = vmatpush2.msra.mxu0 0.0
  %288 = vmatprep.subr.mxu0 0.0
  %289 = vmatpush2.msra.mxu0 0.0
  %290 = vmatprep.subr.mxu0 0.0
  %291 = vmatpush2.msra.mxu0 0.0
  %292 = vmatprep.subr.mxu0 0.0
  %293 = vmatpush2.msra.mxu0 0.0
  %294 = vmatprep.subr.mxu0 0.0
  %295 = vmatpush2.msra.mxu0 0.0
  %296 = vmatprep.subr.mxu0 0.0
  %297 = vmatpush2.msra.mxu0 0.0
  %298 = vmatprep.subr.mxu0 0.0
  %299 = vmatpush2.msra.mxu0 0.0
  %300 = vmatprep.subr.mxu0 0.0
  %301 = vmatpush2.msra.mxu0 0.0
  %302 = vmatprep.subr.mxu0 0.0
  %303 = vmatpush2.msra.mxu0 0.0
  %304 = vmatprep.subr.mxu0 0.0
  %305 = vmatpush2.msra.mxu0 0.0
  %306 = vmatprep.subr.mxu0 0.0
  %307 = vmatpush2.msra.mxu0 0.0
  %308 = vmatprep.mubr.f32.mxu0 0.0
  %309 = vmatmul.mubr.f32.gmra.mxu0 %v239
  %v310 = vpop.f32.mrf.mxu0
  %v311 = vadd.f32 %v235, %v310
  %v312 = vpop.f32.mrf.mxu0
  %313 = vmatprep.mubr.f32.mxu0 0.0
  %314 = vmatmul.mubr.f32.gmra.mxu0 %v242
  %v315 = vpop.f32.mrf.mxu0
  %v316 = vadd.f32 %v235, %v315
  %v317 = vpop.f32.mrf.mxu0
  %318 = vdwg.mxu0
  %v319 = vmax.f32 %v311, 0.0
  %v320 = vmax.f32 %v316, 0.0
  %v321 = vld [vmem:[%s7] sm:$0xff]
  %v322 = vld [vmem:[%s7 + $0x8] sm:$0xff]
  %v323 = vld [vmem:[%s7 + $0x10] sm:$0xff]
  %v324 = vld [vmem:[%s7 + $0x18] sm:$0xff]
  %v325 = vld [vmem:[%s8] sm:$0x1]
  %v327 = vlaneseq
  %v328 = vshrl.u32 %v327, 7
  %v329 = vsub.s32 0, %v328
  %v330 = vrot.slane %v325, %v329
  %v333 = vsel %vm138, %v319, 0
  %v336 = vsel %vm138, %v320, 0
  %338 = vmatprep.subr.mxu0 0.0
  %339 = vmatpush1.msra.mxu0 0.0
  %340 = vmatprep.subr.mxu0 0.0
  %341 = vmatpush1.msra.mxu0 0.0
  %342 = vmatprep.subr.mxu0 0.0
  %343 = vmatpush1.msra.mxu0 0.0
  %344 = vmatprep.subr.mxu0 0.0
  %345 = vmatpush1.msra.mxu0 0.0
  %346 = vmatprep.subr.mxu0 0.0
  %347 = vmatpush1.msra.mxu0 0.0
  %348 = vmatprep.subr.mxu0 0.0
  %349 = vmatpush1.msra.mxu0 0.0
  %350 = vmatprep.subr.mxu0 0.0
  %351 = vmatpush1.msra.mxu0 0.0
  %352 = vmatprep.subr.mxu0 0.0
  %353 = vmatpush1.msra.mxu0 0.0
  %354 = vmatprep.subr.mxu0 0.0
  %355 = vmatpush1.msra.mxu0 0.0
  %356 = vmatprep.subr.mxu0 0.0
  %357 = vmatpush1.msra.mxu0 0.0
  %358 = vmatprep.subr.mxu0 0.0
  %359 = vmatpush1.msra.mxu0 0.0
  %360 = vmatprep.subr.mxu0 0.0
  %361 = vmatpush1.msra.mxu0 0.0
  %362 = vmatprep.subr.mxu0 0.0
  %363 = vmatpush1.msra.mxu0 %v324
  %364 = vmatprep.subr.mxu0 0.0
  %365 = vmatpush1.msra.mxu0 %v323
  %366 = vmatprep.subr.mxu0 0.0
  %367 = vmatpush1.msra.mxu0 %v322
  %368 = vmatprep.subr.mxu0 0.0
  %369 = vmatpush1.msra.mxu0 %v321
  %370 = vmatprep.subr.mxu0 0.0
  %371 = vmatpush2.msra.mxu0 0.0
  %372 = vmatprep.subr.mxu0 0.0
  %373 = vmatpush2.msra.mxu0 0.0
  %374 = vmatprep.subr.mxu0 0.0
  %375 = vmatpush2.msra.mxu0 0.0
  %376 = vmatprep.subr.mxu0 0.0
  %377 = vmatpush2.msra.mxu0 0.0
  %378 = vmatprep.subr.mxu0 0.0
  %379 = vmatpush2.msra.mxu0 0.0
  %380 = vmatprep.subr.mxu0 0.0
  %381 = vmatpush2.msra.mxu0 0.0
  %382 = vmatprep.subr.mxu0 0.0
  %383 = vmatpush2.msra.mxu0 0.0
  %384 = vmatprep.subr.mxu0 0.0
  %385 = vmatpush2.msra.mxu0 0.0
  %386 = vmatprep.subr.mxu0 0.0
  %387 = vmatpush2.msra.mxu0 0.0
  %388 = vmatprep.subr.mxu0 0.0
  %389 = vmatpush2.msra.mxu0 0.0
  %390 = vmatprep.subr.mxu0 0.0
  %391 = vmatpush2.msra.mxu0 0.0
  %392 = vmatprep.subr.mxu0 0.0
  %393 = vmatpush2.msra.mxu0 0.0
  %394 = vmatprep.subr.mxu0 0.0
  %395 = vmatpush2.msra.mxu0 0.0
  %396 = vmatprep.subr.mxu0 0.0
  %397 = vmatpush2.msra.mxu0 0.0
  %398 = vmatprep.subr.mxu0 0.0
  %399 = vmatpush2.msra.mxu0 0.0
  %400 = vmatprep.subr.mxu0 0.0
  %401 = vmatpush2.msra.mxu0 0.0
  %402 = vmatprep.mubr.f32.mxu0 0.0
  %403 = vmatmul.mubr.f32.gmra.mxu0 %v333
  %v404 = vpop.f32.mrf.mxu0
  %v405 = vadd.f32 %v330, %v404
  %v406 = vpop.f32.mrf.mxu0
  %407 = vmatprep.mubr.f32.mxu0 0.0
  %408 = vmatmul.mubr.f32.gmra.mxu0 %v336
  %v409 = vpop.f32.mrf.mxu0
  %v410 = vadd.f32 %v330, %v409
  %v411 = vpop.f32.mrf.mxu0
  %412 = vdwg.mxu0
  %v413 = vmul.f32 %v405, %v405
  %v414 = vmul.f32 %v410, %v410
  %vm415 = vcmask 64512
  %v416 = vsel %vm415, %v413, 0.0
  %417 = vadd.xlane.f32.xlu0 %v416
  %v418 = vpop.xlane.xlu0 %417
  %v419 = vsel %vm415, %v414, 0.0
  %420 = vadd.xlane.f32.xlu0 %v419
  %v421 = vpop.xlane.xlu0 %420
  %v422 = vmax.f32 %v418, 1e-24
  %v423 = vmax.f32 %v421, 1e-24
  %v424 = vrsqrt.pop %v422
  %v425 = vrsqrt.pop %v423
  %v426 = vmul.f32 %v405, %v424
  %v427 = vmul.f32 %v410, %v425
  %428 = vst.msk [vmem:[%s9] sm:$0xff] %vm415, %v426
  %429 = vst.msk [vmem:[%s9 + $0x8] sm:$0xff] %vm415, %v427
  // Predicated region
  $region38: #{tpu_custom_call.1} parent=0 // pred_check
    _
  $region39: #{tpu_custom_call.1} parent=0 // pred_check_branch
    %431 = sbr.rel (0) target = $region41
  $region40: #{tpu_custom_call.1} parent=0 // pred_region
    _
  $region41: #{tpu_custom_call.1} parent=0 // pred_fallthru
    _
  // Predicated region
  $region42: #{tpu_custom_call.1} parent=0 // pred_check
    _
  $region43: #{tpu_custom_call.1} parent=0 // pred_check_branch
    %433 = sbr.rel (0) target = $region45
  $region44: #{tpu_custom_call.1} parent=0 // pred_region
    _
  $region45: #{tpu_custom_call.1} parent=0 // pred_fallthru
    _

</llo_original>
